<compile_context>
chip_gen: v7x
topology: tpu7x:2x2x1
jax: 0.10.0
libtpu: 0.0.40
codegen_flags: <defaults>
</compile_context>

<pallas_src>
import jax
import jax.numpy as jnp
from jax import lax
from jax.experimental import pallas as pl
from jax.experimental.pallas import tpu as pltpu


def _round_up(x, m):
    return -(-x // m) * m


def _sig_t_kernel(w_ref, out_ref):
    tm = w_ref.shape[0]                      # static block row count
    row0 = pl.program_id(0) * tm             # global row offset of this tile
    r = lax.broadcasted_iota(jnp.int32, w_ref.shape, 0) + row0
    c = lax.broadcasted_iota(jnp.int32, w_ref.shape, 1)

    sig = jax.nn.sigmoid(w_ref[...].astype(jnp.float32))   # exp on the EUP

    # T = I + sigmoid(w) * (1 - eye): diagonal -> 1, off-diagonal -> sigmoid(w).
    T = jnp.where(r == c, 1.0, sig)

    # All entries nonnegative -> L1 norm == plain row sum (no jnp.abs needed).
    row_sum = jnp.sum(T, axis=1, keepdims=True)
    denom = jnp.maximum(row_sum, 1e-12)

    # Approx reciprocal on the EUP + one Newton refinement for full f32 accuracy.
    inv = pl.reciprocal(denom, approx=True)
    inv = inv * (2.0 - denom * inv)

    out_ref[...] = (T * inv).astype(out_ref.dtype)


def sig_t_forward(w, out_dtype=jnp.float32):
    """Pallas sig_t forward. w: (C, C) array (any float dtype). Returns (C, C)."""
    C, C2 = w.shape
    assert C == C2, "w must be square"

    in_bytes = jnp.dtype(w.dtype).itemsize
    out_bytes = jnp.dtype(out_dtype).itemsize
    # Double-buffered input block + double-buffered output block per tile row.
    bytes_per_row = 2 * C * (in_bytes + out_bytes)
    vmem_budget = 12 * 1024 * 1024           # fits v5e's 16 MiB default scoped VMEM
    max_tm = max(8, vmem_budget // max(bytes_per_row, 1))

    if C <= 8:
        tm = C                               # one full-array block
    else:
        # Larger tiles for narrow rows (per-grid-step overhead ~0.35 us), smaller
        # cap for wide rows where the VMEM budget dominates anyway.
        cap = 2048 if C <= 512 else (1024 if C <= 1024 else 512)
        tm = min(cap, max_tm, C)
        tm = max(8, (tm // 8) * 8)           # sublane-aligned
        if tm >= C:
            # Split rows across >= 2 blocks so v7x's 2nd TensorCore gets work.
            tm = max(8, _round_up(pl.cdiv(C, 2), 8))

    grid = (pl.cdiv(C, tm),)
    return pl.pallas_call(
        _sig_t_kernel,
        out_shape=jax.ShapeDtypeStruct((C, C), out_dtype),
        grid=grid,
        # Last block dim equals the full array dim -> no host-side lane padding
        # needed; partial edge row-blocks are handled by Pallas (per-row math only,
        # so out-of-range rows never contaminate valid rows).
        in_specs=[pl.BlockSpec((tm, C), lambda i: (i, 0))],
        out_specs=pl.BlockSpec((tm, C), lambda i: (i, 0)),
        compiler_params=pltpu.CompilerParams(
            dimension_semantics=("parallel",)),
    )(w)


def sig_t_reference(w):
    C = w.shape[0]
    identity = jnp.eye(C, dtype=jnp.float32)
    co = jnp.ones((C, C), jnp.float32) - identity
    sig = jax.nn.sigmoid(w.astype(jnp.float32))
    T = identity + sig * co
    denom = jnp.maximum(jnp.sum(jnp.abs(T), axis=1, keepdims=True), 1e-12)
    return T / denom


def make_w(num_classes, init=2, key=None):
    # Mirrors sig_t.__init__: w = -init * ones(C, C), plus a tiny deterministic
    # perturbation so the synthetic example is non-degenerate.
    w = -init * jnp.ones((num_classes, num_classes), jnp.float32)
    if key is not None:
        w = w + 0.01 * jax.random.normal(key, (num_classes, num_classes),
                                         jnp.float32)
    return w


if __name__ == "__main__":
    # Primary example at the module's natural small size.
    num_classes = 16
    key = jax.random.PRNGKey(0)
    w = make_w(num_classes, init=2, key=key)

    T = jax.block_until_ready(sig_t_forward(w))
    T_ref = sig_t_reference(w)
    assert T.shape == (num_classes, num_classes)
    assert jnp.allclose(T, T_ref, atol=1e-6), "mismatch vs reference (C=16)"
    assert jnp.allclose(jnp.sum(T, axis=1), jnp.ones(num_classes), atol=1e-6)

    # Second shape that is not a multiple of 128 (exercises the full-dim lane
    # BlockSpec and a partial edge row-block / multi-step parallel grid).
    C2 = 200
    w2 = make_w(C2, init=2, key=jax.random.PRNGKey(1))
    T2 = jax.block_until_ready(sig_t_forward(w2))
    assert jnp.allclose(T2, sig_t_reference(w2), atol=1e-6), "mismatch (C=200)"
    assert jnp.allclose(jnp.sum(T2, axis=1), jnp.ones(C2), atol=1e-6)

    print("KERNEL_OK")
</pallas_src>

<mosaic_0001>
module attributes {stable_mosaic.version = 11 : i64} {
  func.func @_sig_t_kernel(%arg0: i32, %arg1: memref<8x16xf32, #tpu.memory_space<vmem>>, %arg2: memref<8x16xf32, #tpu.memory_space<vmem>>) attributes {dimension_semantics = [#tpu.dimension_semantics<parallel>], iteration_bounds = array<i64: 2>, scalar_prefetch = 0 : i64, scratch_operands = 0 : i64, tpu.core_type = #tpu.core_type<tc>, window_params = [{transform_indices = @transform_0, window_bounds = array<i64: 8, 16>}, {transform_indices = @transform_1, window_bounds = array<i64: 8, 16>}]} {
    %c8_i32 = arith.constant 8 : i32
    %0 = arith.muli %arg0, %c8_i32 : i32
    %1 = tpu.iota {dimensions = array<i32: 0>} : vector<8x16xi32>
    %2 = vector.broadcast %0 : i32 to vector<8x16xi32>
    %3 = arith.addi %1, %2 : vector<8x16xi32>
    %4 = tpu.iota {dimensions = array<i32: 1>} : vector<8x16xi32>
    %c0 = arith.constant 0 : index
    %c0_0 = arith.constant 0 : index
    %5 = vector.load %arg1[%c0, %c0_0] : memref<8x16xf32, #tpu.memory_space<vmem>>, vector<8x16xf32>
    %6 = arith.negf %5 : vector<8x16xf32>
    %7 = math.exp %6 : vector<8x16xf32>
    %cst = arith.constant 1.000000e+00 : f32
    %8 = vector.broadcast %cst : f32 to vector<8x16xf32>
    %9 = arith.addf %8, %7 : vector<8x16xf32>
    %10 = arith.divf %8, %9 : vector<8x16xf32>
    %11 = arith.cmpi eq, %3, %4 : vector<8x16xi32>
    %cst_1 = arith.constant 1.000000e+00 : f32
    %12 = vector.broadcast %cst_1 : f32 to vector<8x16xf32>
    %13 = arith.select %11, %12, %10 : vector<8x16xi1>, vector<8x16xf32>
    %cst_2 = arith.constant dense<0.000000e+00> : vector<8xf32>
    %14 = vector.multi_reduction <add>, %13, %cst_2 [1] : vector<8x16xf32> to vector<8xf32>
    %15 = vector.shape_cast %14 : vector<8xf32> to vector<8x1xf32>
    %cst_3 = arith.constant 9.99999996E-13 : f32
    %16 = vector.broadcast %cst_3 : f32 to vector<8x1xf32>
    %17 = arith.maximumf %15, %16 : vector<8x1xf32>
    %18 = tpu.reciprocal %17 {approx = true} : vector<8x1xf32> -> vector<8x1xf32>
    %19 = arith.mulf %17, %18 : vector<8x1xf32>
    %cst_4 = arith.constant 2.000000e+00 : f32
    %20 = vector.broadcast %cst_4 : f32 to vector<8x1xf32>
    %21 = arith.subf %20, %19 : vector<8x1xf32>
    %22 = arith.mulf %18, %21 : vector<8x1xf32>
    %23 = vector.broadcast %22 : vector<8x1xf32> to vector<8x16xf32>
    %24 = arith.mulf %13, %23 : vector<8x16xf32>
    %c0_5 = arith.constant 0 : index
    %c0_6 = arith.constant 0 : index
    %25 = vector.load %arg2[%c0_5, %c0_6] : memref<8x16xf32, #tpu.memory_space<vmem>>, vector<8x16xf32>
    tpu.vector_store %arg2[%c0_5, %c0_6], %24 {strides = array<i32>} : memref<8x16xf32, #tpu.memory_space<vmem>>, vector<8x16xf32>,
    return
  }
  func.func @transform_0(%arg0: i32) -> (i32, i32) {
    %c0_i32 = arith.constant 0 : i32
    %c0_i32_0 = arith.constant 0 : i32
    return %arg0, %c0_i32 : i32, i32
  }
  func.func @transform_1(%arg0: i32) -> (i32, i32) {
    %c0_i32 = arith.constant 0 : i32
    %c0_i32_0 = arith.constant 0 : i32
    return %arg0, %c0_i32 : i32, i32
  }
}

</mosaic_0001>

<llo_original>
// kernel: tpu_custom_call.1
$region0: #{tpu_custom_call.1}
  #allocation0 [shape = 'u32[]', space=smem, size = 0x4, offset = 0x4, fixed_abs, tag = 'smem constant byte address 0x4 - core index']
  #allocation1 [shape = 'u32[144,128]{1,0:T(1,128)}', space=vmem, size = 0x12000, scoped, tag = 'internal scratch']
  %s0 = inlined_call_operand.hbm [shape: f32[16,16], index: 0, kind: input, shape index: {}]
  %s1 = inlined_call_operand.hbm [shape: f32[16,16], index: 1, kind: output, shape index: {}]
  %s2 = sld [smem:[#allocation0]]
  $region41: #{tpu_custom_call.1} parent=0
    _
  %s4 = ssub.s32 1, %s2
  %s5 = scalar_select 0, %s4, %s2
  $region1: #{tpu_custom_call.1} parent=0
    #allocation2 [shape = 'u8[8192]{0}', space=vmem, size = 0x2000, scoped, tag = 'input window, operand 0']
    #allocation3 [shape = 's32[2]{0}', space=sflag, size = 0x8, scoped, tag = 'scoped memory for tpu_custom_call.1']
    #allocation4 [shape = 's32[2]{0}', space=sflag, size = 0x8, scoped, tag = 'scoped memory for tpu_custom_call.1']
    #allocation5 [shape = 'u8[8192]{0}', space=vmem, size = 0x2000, scoped, tag = 'output window, operand 0']
    %6 = vsyncpa [#allocation3], 0
    %s7 = scalar_lea.sflag [#allocation3], 1
    %8 = vsyncpa %s7, 0
    %9 = vsyncpa [#allocation4], 0
    %s10 = scalar_lea.sflag [#allocation4], 1
    %11 = vsyncpa %s10, 0
    loop: start=0, step=1, limit=4
    $region2: #{tpu_custom_call.1} parent=1 // loop_pre_header
      _
    $region3: #{tpu_custom_call.1} parent=1 // loop_header
      %s13 = sphi 0, %s17
      %p14 = scmp.ge.s32.totalorder %s13, 4
      %s23 = sphi 0, %s25
      %s26 = sphi 0, %s23
      %s27 = sphi 0, %s26
      %s43 = sphi 0, %s27
      %s49 = sphi 0, %s51
      %s52 = sphi 0, %s49
      %s53 = sphi 0, %s52
      %s69 = sphi 0, %s53
    $region4: #{tpu_custom_call.1} parent=1 // loop_header_branch
      %16 = sbr.rel (%p14) target = $region8
    $region5: #{tpu_custom_call.1} parent=1 // loop_body
      %s18 = ssub.s32 %s13, 1
      %s19 = ssub.s32 %s13, 2
      %s20 = sadd.s32 %s13, 1
      %s21 = ssub.s32 %s13, %s20
      %p22 = scmp.eq.s32.totalorder %s21, 0
      %s24 = sadd.s32 %s23, 1
      %s25 = scalar_select %p22, %s23, %s24
      %p28 = pneg %p22
      %p29 = scmp.eq.s32.totalorder %s13, 1
      %p30 = por %p28, %p29
      %p31 = scmp.ne.s32.totalorder %s23, %s26
      %p32 = scmp.eq.s32.totalorder %s13, 0
      %p33 = por %p31, %p32
      %p34 = scmp.ne.s32.totalorder %s23, %s26
      %p35 = scmp.eq.s32.totalorder %s18, 1
      %p36 = por %p34, %p35
      %p37 = scmp.ne.s32.totalorder %s26, %s27
      %p38 = scmp.eq.s32.totalorder %s18, 0
      %p39 = por %p37, %p38
      %p40 = scmp.ne.s32.totalorder %s26, %s27
      %p41 = scmp.eq.s32.totalorder %s19, 1
      %p42 = por %p40, %p41
      %p44 = scmp.ne.s32.totalorder %s27, %s43
      %p45 = scmp.eq.s32.totalorder %s19, 0
      %p46 = por %p44, %p45
      %s47 = ssub.s32 %s13, %s20
      %p48 = scmp.eq.s32.totalorder %s47, 0
      %s50 = sadd.s32 %s49, 1
      %s51 = scalar_select %p48, %s49, %s50
      %p54 = pneg %p48
      %p55 = scmp.eq.s32.totalorder %s13, 1
      %p56 = por %p54, %p55
      %p57 = scmp.ne.s32.totalorder %s49, %s52
      %p58 = scmp.eq.s32.totalorder %s13, 0
      %p59 = por %p57, %p58
      %p60 = scmp.ne.s32.totalorder %s49, %s52
      %p61 = scmp.eq.s32.totalorder %s18, 1
      %p62 = por %p60, %p61
      %p63 = scmp.ne.s32.totalorder %s52, %s53
      %p64 = scmp.eq.s32.totalorder %s18, 0
      %p65 = por %p63, %p64
      %p66 = scmp.ne.s32.totalorder %s52, %s53
      %p67 = scmp.eq.s32.totalorder %s19, 1
      %p68 = por %p66, %p67
      %p70 = scmp.ne.s32.totalorder %s53, %s69
      %p71 = scmp.eq.s32.totalorder %s19, 0
      %p72 = por %p70, %p71
      %p73 = scmp.le.s32.totalorder 1, %s13
      %p74 = scmp.lt.s32.totalorder %s13, 3
      %p75 = pnand %p73, %p74
      %p76 = pneg %p75
      // Predicated region
      $region9: #{tpu_custom_call.1} parent=5 // pred_check
        _
      $region10: #{tpu_custom_call.1} parent=5 // pred_check_branch
        %78 = sbr.rel (%p75) target = $region12
      $region11: #{tpu_custom_call.1} parent=5 // pred_region
        %s79 = ssub.s32 %s13, 1
      $region12: #{tpu_custom_call.1} parent=5 // pred_fallthru
        _
      %p80 = scmp.lt.s32.totalorder %s13, 2
      // Predicated region
      $region13: #{tpu_custom_call.1} parent=5 // pred_check
        %p81 = pneg %p80
      $region14: #{tpu_custom_call.1} parent=5 // pred_check_branch
        %83 = sbr.rel (%p81) target = $region16
      $region15: #{tpu_custom_call.1} parent=5 // pred_region
        // Predicated region
        $region17: #{tpu_custom_call.1} parent=15 // pred_check
          %p84 = pneg %p33
        $region18: #{tpu_custom_call.1} parent=15 // pred_check_branch
          %86 = sbr.rel (%p84) target = $region20
        $region19: #{tpu_custom_call.1} parent=15 // pred_region
          %s87 = sand.u32 %s23, 1
          %s88 = scalar_lea.sflag [#allocation3], %s87
          %s89 = sand.u32 %s23, 1
          %s90 = smul.addr %s89, 8
          %s91 = scalar_lea.vmem [#allocation2], %s90
          %s93 = ssub.s32 128, 128
          %94 = vsyncadd %s88, %s93
          %s95 = smul.addr %s13, 128
          %s96 = scalar_lea.hbm %s0, %s95
          %s98 = sshll.u32 %s91, 4
          %s99 = int_to_ptr.vmem [resolvable:$true] %s98
          %101 = dma.hbm_to_vmem [thread:$0]  %s96, 128, %s99, %s88
        $region20: #{tpu_custom_call.1} parent=15 // pred_fallthru
          _
      $region16: #{tpu_custom_call.1} parent=5 // pred_fallthru
        _
      %p102 = scmp.le.s32.totalorder 1, %s13
      %p103 = scmp.lt.s32.totalorder %s13, 3
      %p104 = pnand %p102, %p103
      %p105 = pneg %p104
      // Predicated region
      $region21: #{tpu_custom_call.1} parent=5 // pred_check
        _
      $region22: #{tpu_custom_call.1} parent=5 // pred_check_branch
        %107 = sbr.rel (%p104) target = $region24
      $region23: #{tpu_custom_call.1} parent=5 // pred_region
        %s108 = ssub.s32 %s13, 1
        %s109 = sand.u32 %s26, 1
        %s110 = scalar_lea.sflag [#allocation3], %s109
        %s111 = sand.u32 %s26, 1
        %s112 = smul.addr %s111, 8
        %s113 = scalar_lea.vmem [#allocation2], %s112
        // Predicated region
        $region25: #{tpu_custom_call.1} parent=23 // pred_check
          %p114 = pneg %p39
        $region26: #{tpu_custom_call.1} parent=23 // pred_check_branch
          %116 = sbr.rel (%p114) target = $region28
        $region27: #{tpu_custom_call.1} parent=23 // pred_region
          %117 = dma.done %s110, 128
        $region28: #{tpu_custom_call.1} parent=23 // pred_fallthru
          _
        %s118 = sand.u32 %s26, 1
        %s119 = scalar_lea.sflag [#allocation3], %s118
        %s120 = sand.u32 %s26, 1
        %s121 = smul.addr %s120, 8
        %s122 = scalar_lea.vmem [#allocation2], %s121
        %p123 = pneg %p39
        %p124 = pneg %p36
        %p125 = pneg %p65
        %p126 = pneg %p62
        %s127 = sand.u32 %s52, 1
        %s128 = scalar_lea.sflag [#allocation4], %s127
        %s129 = sand.u32 %s52, 1
        %s130 = smul.addr %s129, 8
        %s131 = scalar_lea.vmem [#allocation5], %s130
        %s132 = smul.u32 %s18, 8
        %v133 = vlaneseq
        %v134 = vshrl.u32 %v133, 7
        %v135 = vstv %s132
        %v136 = vadd.s32 %v134, %v135
        %v137 = vlaneseq
        %v138 = vand.u32 %v137, 127
        %v139 = vld [vmem:[%s113] sm:$0xff]
        %v140 = vxor.u32 %v139, 2147483648
        %v141 = vmul.f32 %v140, 1.442695
        %v142 = vpow.pop %v141
        %v143 = vadd.f32 %v142, 1.0
        %v144 = vrcp.pop %v143
        %v145 = vmul.f32 1.0, %v144
        %vm146 = vcmp.eq.s32.totalorder %v136, %v138
        %v147 = vsel %vm146, 1.0, %v145
        %vm148 = vcmask 130048
        %v149 = vsel %vm148, %v147, 0.0
        %150 = vadd.xlane.f32.xlu0 %v149
        %v151 = vpop.xlane.xlu0 %150
        %v152 = vmax.f32 %v151, 1e-12
        %v153 = vrcp.pop %v152
        %v154 = vmul.f32 %v152, %v153
        %v155 = vsub.f32 2.0, %v154
        %v156 = vmul.f32 %v153, %v155
        %v157 = vmul.f32 %v147, %v156
        %158 = vst.msk [vmem:[%s131] sm:$0xff] %vm148, %v157
        %s159 = sand.u32 %s52, 1
        %s160 = scalar_lea.sflag [#allocation4], %s159
        %s161 = sand.u32 %s52, 1
        %s162 = smul.addr %s161, 8
        %s163 = scalar_lea.vmem [#allocation5], %s162
        // Predicated region
        $region29: #{tpu_custom_call.1} parent=23 // pred_check
          %p164 = pneg %p62
        $region30: #{tpu_custom_call.1} parent=23 // pred_check_branch
          %166 = sbr.rel (%p164) target = $region32
        $region31: #{tpu_custom_call.1} parent=23 // pred_region
          %s168 = ssub.s32 128, 128
          %169 = vsyncadd %s160, %s168
          %s170 = smul.addr %s18, 128
          %s171 = scalar_lea.hbm %s1, %s170
          %s173 = sshll.u32 %s163, 4
          %s174 = int_to_ptr.vmem [resolvable:$true] %s173
          %176 = dma.vmem_to_hbm [thread:$0]  %s174, 128, %s171, %s160
        $region32: #{tpu_custom_call.1} parent=23 // pred_fallthru
          _
      $region24: #{tpu_custom_call.1} parent=5 // pred_fallthru
        _
      %p177 = scmp.le.s32.totalorder 2, %s13
      // Predicated region
      $region33: #{tpu_custom_call.1} parent=5 // pred_check
        %p178 = pneg %p177
      $region34: #{tpu_custom_call.1} parent=5 // pred_check_branch
        %180 = sbr.rel (%p178) target = $region36
      $region35: #{tpu_custom_call.1} parent=5 // pred_region
        %s181 = ssub.s32 %s13, 2
        // Predicated region
        $region37: #{tpu_custom_call.1} parent=35 // pred_check
          %p182 = pneg %p68
        $region38: #{tpu_custom_call.1} parent=35 // pred_check_branch
          %184 = sbr.rel (%p182) target = $region40
        $region39: #{tpu_custom_call.1} parent=35 // pred_region
          %s185 = sand.u32 %s53, 1
          %s186 = scalar_lea.sflag [#allocation4], %s185
          %s187 = sand.u32 %s53, 1
          %s188 = smul.addr %s187, 8
          %s189 = scalar_lea.vmem [#allocation5], %s188
          %190 = dma.done %s186, 128
        $region40: #{tpu_custom_call.1} parent=35 // pred_fallthru
          _
      $region36: #{tpu_custom_call.1} parent=5 // pred_fallthru
        _
    $region6: #{tpu_custom_call.1} parent=1 // loop_footer
      %s17 = sadd.s32 1, %s13
    $region7: #{tpu_custom_call.1} parent=1 // loop_footer_branch
      %12 = sbr.rel target = $region3
    $region8: #{tpu_custom_call.1} parent=1 // loop_exit
      _
    %191 = vsyncpa [#allocation3], 1
    %s192 = scalar_lea.sflag [#allocation3], 1
    %193 = vsyncpa %s192, 1
    %194 = vsyncpa [#allocation4], 1
    %s195 = scalar_lea.sflag [#allocation4], 1
    %196 = vsyncpa %s195, 1

</llo_original>
